<compile_context>
chip_gen: v6e
topology: v6e:2x2x1
jax: 0.10.0
libtpu: 0.0.40
codegen_flags: <defaults>
</compile_context>

<pallas_src>
import math
from functools import partial

import jax
import jax.numpy as jnp
from jax.experimental import pallas as pl
from jax.experimental.pallas import tpu as pltpu


def _cross_attn_kernel(x_ref, wq_ref, qnw_ref, k_ref, v_ref, mask_ref,
                       fmask_ref, wo_ref, o_ref, acc_ref, *, scale, eps):
    # x_ref:    (1, tq, dim)         query-token tile
    # wq_ref:   (1, dim, head_dim)   Wq slice for this head (pre-transposed)
    # qnw_ref:  (1, head_dim)        q_norm RMSNorm weight
    # k_ref:    (1, 1, seqlen_y, head_dim)
    # v_ref:    (1, 1, seqlen_y, head_dim)
    # mask_ref: (1, 1, tq, seqlen_y) additive float attention mask
    # fmask_ref:(1, 1, tq, 1)        full_text_row_masked_out_mask
    # wo_ref:   (1, head_dim, dim)   Wo slice for this head (pre-transposed)
    # o_ref:    (1, tq, dim)         output tile (accumulated over heads)
    # acc_ref:  (tq, dim) f32        VMEM accumulator across the head axis
    h = pl.program_id(2)

    @pl.when(h == 0)
    def _():
        acc_ref[...] = jnp.zeros_like(acc_ref)

    # ---- Q projection for this head: (tq, dim) @ (dim, head_dim) on MXU ----
    x = x_ref[0]                                                    # native dtype
    q = jnp.dot(x, wq_ref[0], preferred_element_type=jnp.float32)   # (tq, hd) f32

    # ---- q_norm: RMSNorm over head_dim with learned weight ----
    ms = jnp.mean(q * q, axis=-1, keepdims=True)
    q = q * jax.lax.rsqrt(ms + eps)
    q = q * qnw_ref[...].astype(jnp.float32)                        # (1, hd) bcast
    q = q.astype(k_ref.dtype)                                       # MXU-native dtype

    # ---- scaled dot-product attention with additive float mask ----
    k = k_ref[0, 0]                                                 # (sy, hd)
    v = v_ref[0, 0]                                                 # (sy, hd)
    s = jax.lax.dot_general(q, k, (((1,), (1,)), ((), ())),
                            preferred_element_type=jnp.float32) * scale
    s = s + mask_ref[0, 0].astype(jnp.float32)                      # (tq, sy)
    m = jnp.max(s, axis=-1, keepdims=True)
    p = jnp.exp(s - m)
    p = p * pl.reciprocal(jnp.sum(p, axis=-1, keepdims=True), approx=False)
    o = jnp.dot(p.astype(v.dtype), v, preferred_element_type=jnp.float32)  # (tq, hd)

    # rows of text that attend to no media are zeroed out
    o = o * fmask_ref[0, 0].astype(jnp.float32)                     # (tq, 1) bcast

    # ---- output projection slice for this head, reduced over heads ----
    acc_ref[...] += jnp.dot(o.astype(wo_ref.dtype), wo_ref[0],
                            preferred_element_type=jnp.float32)

    @pl.when(h == pl.num_programs(2) - 1)
    def _():
        # TODO(synk): model-parallel all-reduce of `out` omitted (world size 1 -> identity).
        o_ref[0] = acc_ref[...].astype(o_ref.dtype)


def _pick_q_tile(seqlen, max_tile=256):
    if seqlen <= max_tile:
        return seqlen
    for t in range(max_tile, 7, -8):
        if seqlen % t == 0:
            return t
    return seqlen  # fall back to the whole sequence per block


def cross_attention_forward(x, wq, wo, q_norm_w, xattn_mask,
                            full_text_row_masked_out_mask, xattn_cache,
                            *, norm_eps=1e-5, q_tile=None):
    """Pallas TPU forward of CrossAttention (single device, MP world size 1).

    x:  (bsz, seqlen, dim)
    wq: (n_heads*head_dim, dim)   torch Linear layout (out_features, in_features)
    wo: (dim, n_heads*head_dim)
    q_norm_w: (head_dim,)
    xattn_mask: (bsz, 1, seqlen, seqlen_y)   additive float mask (bcast over heads)
    full_text_row_masked_out_mask: (bsz, 1, seqlen, 1)
    xattn_cache: (2, bsz, n_heads, seqlen_y, head_dim) stacked (xk, xv), as produced
        by compute_xattn_kv_cache (xk already k_norm'ed and head-repeated).
    """
    bsz, seqlen, dim = x.shape
    xk = xattn_cache[0]
    xv = xattn_cache[1]
    _, n_heads, seqlen_y, head_dim = xk.shape

    # Per-head weight slabs, pre-transposed so the kernel runs row-major matmuls.
    wq_h = wq.reshape(n_heads, head_dim, dim).transpose(0, 2, 1)   # (H, dim, hd)
    wo_h = wo.T.reshape(n_heads, head_dim, dim)                    # (H, hd, dim)
    qnw = q_norm_w.reshape(1, head_dim)

    tq = q_tile if q_tile is not None else _pick_q_tile(seqlen)
    assert seqlen % tq == 0, "seqlen must be divisible by the q tile"
    n_q = seqlen // tq

    scale = 1.0 / math.sqrt(head_dim)

    flops = int(2 * bsz * n_heads * seqlen * head_dim * (2 * dim + 2 * seqlen_y))
    bytes_accessed = int(2 * x.nbytes + wq_h.nbytes + qnw.nbytes + xk.nbytes
                         + xv.nbytes + xattn_mask.nbytes
                         + full_text_row_masked_out_mask.nbytes + wo_h.nbytes)
    cost = pl.CostEstimate(flops=flops,
                           transcendentals=int(bsz * n_heads * seqlen * seqlen_y),
                           bytes_accessed=bytes_accessed)

    kernel = partial(_cross_attn_kernel, scale=scale, eps=norm_eps)

    out = pl.pallas_call(
        kernel,
        out_shape=jax.ShapeDtypeStruct((bsz, seqlen, dim), x.dtype),
        grid_spec=pltpu.PrefetchScalarGridSpec(
            num_scalar_prefetch=0,
            grid=(bsz, n_q, n_heads),
            in_specs=[
                pl.BlockSpec((1, tq, dim), lambda b, i, h: (b, i, 0)),                 # x tile
                pl.BlockSpec((1, dim, head_dim), lambda b, i, h: (h, 0, 0)),           # Wq[h]
                pl.BlockSpec((1, head_dim), lambda b, i, h: (0, 0)),                   # q_norm w
                pl.BlockSpec((1, 1, seqlen_y, head_dim), lambda b, i, h: (b, h, 0, 0)),  # K
                pl.BlockSpec((1, 1, seqlen_y, head_dim), lambda b, i, h: (b, h, 0, 0)),  # V
                pl.BlockSpec((1, 1, tq, seqlen_y), lambda b, i, h: (b, 0, i, 0)),      # attn mask
                pl.BlockSpec((1, 1, tq, 1), lambda b, i, h: (b, 0, i, 0)),             # row mask
                pl.BlockSpec((1, head_dim, dim), lambda b, i, h: (h, 0, 0)),           # Wo[h]
            ],
            out_specs=pl.BlockSpec((1, tq, dim), lambda b, i, h: (b, i, 0)),
            scratch_shapes=[pltpu.VMEM((tq, dim), jnp.float32)],
        ),
        compiler_params=pltpu.CompilerParams(
            dimension_semantics=("parallel", "parallel", "arbitrary")),
        cost_estimate=cost,
    )(x, wq_h, qnw, xk, xv, xattn_mask, full_text_row_masked_out_mask, wo_h)

    return out


if __name__ == "__main__":
    # Small shapes consistent with the module (lane-dense dims: 128 / 256).
    bsz, seqlen, dim = 2, 16, 256
    n_heads, head_dim = 4, 128
    seqlen_y = 128
    norm_eps = 1e-5

    key = jax.random.PRNGKey(0)
    ks = jax.random.split(key, 8)

    x = jax.random.normal(ks[0], (bsz, seqlen, dim), dtype=jnp.float32)
    # torch Linear weight layout: (out_features, in_features)
    wq = jax.random.normal(ks[1], (n_heads * head_dim, dim), dtype=jnp.float32) * 0.05
    wo = jax.random.normal(ks[2], (dim, n_heads * head_dim), dtype=jnp.float32) * 0.05
    q_norm_w = 1.0 + 0.1 * jax.random.normal(ks[3], (head_dim,), dtype=jnp.float32)

    # xattn_cache as produced by compute_xattn_kv_cache (xk already k_norm'ed and
    # repeated to n_heads); here drawn directly since forward() consumes the cache.
    xk = jax.random.normal(ks[4], (bsz, n_heads, seqlen_y, head_dim), dtype=jnp.float32)
    xv = jax.random.normal(ks[5], (bsz, n_heads, seqlen_y, head_dim), dtype=jnp.float32)
    xattn_cache = jnp.stack([xk, xv])

    # Additive float cross-attention mask (0 = visible, large negative = masked),
    # broadcast over heads; first key kept visible so no row is fully masked.
    vis = jax.random.bernoulli(ks[6], 0.8, (bsz, 1, seqlen, seqlen_y))
    vis = vis.at[..., 0].set(True)
    xattn_mask = jnp.where(vis, 0.0, -1e9).astype(jnp.float32)

    # Rows of text with no media to attend to are zeroed out after attention.
    row_keep = jax.random.bernoulli(ks[7], 0.9, (bsz, 1, seqlen, 1))
    full_text_row_masked_out_mask = row_keep.astype(jnp.float32)

    out = cross_attention_forward(x, wq, wo, q_norm_w, xattn_mask,
                                  full_text_row_masked_out_mask, xattn_cache,
                                  norm_eps=norm_eps)
    out = jax.block_until_ready(out)

    # ---- plain-JAX reference (same math as the torch forward) ----
    hp = jax.lax.Precision.HIGHEST
    xq = jnp.einsum("bsd,ed->bse", x, wq, precision=hp)
    xq = xq.reshape(bsz, seqlen, n_heads, head_dim)
    ms = jnp.mean(xq * xq, axis=-1, keepdims=True)
    xq = xq * jax.lax.rsqrt(ms + norm_eps) * q_norm_w
    xq = xq.transpose(0, 2, 1, 3)                                   # (b, h, s, hd)
    s = jnp.einsum("bhqd,bhkd->bhqk", xq, xk, precision=hp) / math.sqrt(head_dim)
    s = s + xattn_mask
    p = jax.nn.softmax(s, axis=-1)
    o = jnp.einsum("bhqk,bhkd->bhqd", p, xv, precision=hp)
    o = o * full_text_row_masked_out_mask
    o = o.transpose(0, 2, 1, 3).reshape(bsz, seqlen, n_heads * head_dim)
    ref = jnp.einsum("bse,de->bsd", o, wo, precision=hp)

    max_diff = jnp.max(jnp.abs(out - ref))
    assert jnp.allclose(out, ref, atol=5e-3, rtol=5e-3), (
        f"mismatch vs reference, max abs diff {max_diff:.3e}")
    print("KERNEL_OK")
</pallas_src>

<mosaic_0001>
module attributes {stable_mosaic.version = 11 : i64} {
  func.func @_cross_attn_kernel(%arg0: i32, %arg1: i32, %arg2: i32, %arg3: memref<1x16x256xf32, #tpu.memory_space<vmem>>, %arg4: memref<1x256x128xf32, #tpu.memory_space<vmem>>, %arg5: memref<1x128xf32, #tpu.memory_space<vmem>>, %arg6: memref<1x1x128x128xf32, #tpu.memory_space<vmem>>, %arg7: memref<1x1x128x128xf32, #tpu.memory_space<vmem>>, %arg8: memref<1x1x16x128xf32, #tpu.memory_space<vmem>>, %arg9: memref<1x1x16x1xf32, #tpu.memory_space<vmem>>, %arg10: memref<1x128x256xf32, #tpu.memory_space<vmem>>, %arg11: memref<1x16x256xf32, #tpu.memory_space<vmem>>, %arg12: memref<16x256xf32, #tpu.memory_space<vmem>>) attributes {dimension_semantics = [#tpu.dimension_semantics<parallel>, #tpu.dimension_semantics<parallel>, #tpu.dimension_semantics<arbitrary>], iteration_bounds = array<i64: 2, 1, 4>, scalar_prefetch = 0 : i64, scratch_operands = 1 : i64, tpu.core_type = #tpu.core_type<tc>, window_params = [{transform_indices = @transform_0, window_bounds = array<i64: 1, 16, 256>}, {transform_indices = @transform_1, window_bounds = array<i64: 1, 256, 128>}, {pipeline_mode = #tpu.pipeline_mode<synchronous>, transform_indices = @transform_2, window_bounds = array<i64: 1, 128>}, {transform_indices = @transform_3, window_bounds = array<i64: 1, 1, 128, 128>}, {transform_indices = @transform_4, window_bounds = array<i64: 1, 1, 128, 128>}, {transform_indices = @transform_5, window_bounds = array<i64: 1, 1, 16, 128>}, {transform_indices = @transform_6, window_bounds = array<i64: 1, 1, 16, 1>}, {transform_indices = @transform_7, window_bounds = array<i64: 1, 128, 256>}, {transform_indices = @transform_8, window_bounds = array<i64: 1, 16, 256>}]} {
    %c0_i32 = arith.constant 0 : i32
    %0 = arith.cmpi eq, %arg2, %c0_i32 : i32
    %1 = arith.extui %0 : i1 to i32
    %c0_i32_0 = arith.constant 0 : i32
    %2 = arith.cmpi ne, %1, %c0_i32_0 : i32
    scf.if %2 {
      %cst_41 = arith.constant 0.000000e+00 : f32
      %55 = vector.broadcast %cst_41 : f32 to vector<16x256xf32>
      %c0_42 = arith.constant 0 : index
      %c0_43 = arith.constant 0 : index
      %56 = vector.load %arg12[%c0_42, %c0_43] : memref<16x256xf32, #tpu.memory_space<vmem>>, vector<16x256xf32>
      tpu.vector_store %arg12[%c0_42, %c0_43], %55 {strides = array<i32>} : memref<16x256xf32, #tpu.memory_space<vmem>>, vector<16x256xf32>,
    } else {
    }
    %c0 = arith.constant 0 : index
    %c0_1 = arith.constant 0 : index
    %c0_2 = arith.constant 0 : index
    %3 = vector.load %arg3[%c0, %c0_1, %c0_2] : memref<1x16x256xf32, #tpu.memory_space<vmem>>, vector<1x16x256xf32>
    %4 = vector.shape_cast %3 : vector<1x16x256xf32> to vector<16x256xf32>
    %c0_3 = arith.constant 0 : index
    %c0_4 = arith.constant 0 : index
    %c0_5 = arith.constant 0 : index
    %5 = vector.load %arg4[%c0_3, %c0_4, %c0_5] : memref<1x256x128xf32, #tpu.memory_space<vmem>>, vector<1x256x128xf32>
    %6 = vector.shape_cast %5 : vector<1x256x128xf32> to vector<256x128xf32>
    %cst = arith.constant dense<0.000000e+00> : vector<16x128xf32>
    %7 = tpu.matmul %4, %6, %cst {dimension_numbers = #tpu.dot_dimension_numbers<[1], [0], [0], [1], [0, 0, 1, 1], [], []>} : vector<16x256xf32>, vector<256x128xf32>, vector<16x128xf32> -> vector<16x128xf32>
    %8 = arith.mulf %7, %7 : vector<16x128xf32>
    %cst_6 = arith.constant dense<0.000000e+00> : vector<16xf32>
    %9 = vector.multi_reduction <add>, %8, %cst_6 [1] : vector<16x128xf32> to vector<16xf32>
    %10 = vector.shape_cast %9 : vector<16xf32> to vector<16x1xf32>
    %cst_7 = arith.constant 1.280000e+02 : f32
    %11 = vector.broadcast %cst_7 : f32 to vector<16x1xf32>
    %12 = arith.divf %10, %11 : vector<16x1xf32>
    %cst_8 = arith.constant 9.99999974E-6 : f32
    %13 = vector.broadcast %cst_8 : f32 to vector<16x1xf32>
    %14 = arith.addf %12, %13 : vector<16x1xf32>
    %15 = math.rsqrt %14 : vector<16x1xf32>
    %16 = vector.broadcast %15 : vector<16x1xf32> to vector<16x128xf32>
    %17 = arith.mulf %7, %16 : vector<16x128xf32>
    %c0_9 = arith.constant 0 : index
    %c0_10 = arith.constant 0 : index
    %18 = vector.load %arg5[%c0_9, %c0_10] : memref<1x128xf32, #tpu.memory_space<vmem>>, vector<1x128xf32>
    %19 = vector.broadcast %18 : vector<1x128xf32> to vector<16x128xf32>
    %20 = arith.mulf %17, %19 : vector<16x128xf32>
    %c0_11 = arith.constant 0 : index
    %c0_12 = arith.constant 0 : index
    %c0_13 = arith.constant 0 : index
    %c0_14 = arith.constant 0 : index
    %21 = vector.load %arg6[%c0_11, %c0_12, %c0_13, %c0_14] : memref<1x1x128x128xf32, #tpu.memory_space<vmem>>, vector<1x1x128x128xf32>
    %22 = vector.shape_cast %21 : vector<1x1x128x128xf32> to vector<128x128xf32>
    %c0_15 = arith.constant 0 : index
    %c0_16 = arith.constant 0 : index
    %c0_17 = arith.constant 0 : index
    %c0_18 = arith.constant 0 : index
    %23 = vector.load %arg7[%c0_15, %c0_16, %c0_17, %c0_18] : memref<1x1x128x128xf32, #tpu.memory_space<vmem>>, vector<1x1x128x128xf32>
    %24 = vector.shape_cast %23 : vector<1x1x128x128xf32> to vector<128x128xf32>
    %cst_19 = arith.constant dense<0.000000e+00> : vector<16x128xf32>
    %25 = tpu.matmul %20, %22, %cst_19 {dimension_numbers = #tpu.dot_dimension_numbers<[1], [1], [0], [0], [0, 0, 1, 0], [], []>} : vector<16x128xf32>, vector<128x128xf32>, vector<16x128xf32> -> vector<16x128xf32>
    %cst_20 = arith.constant 0.0883883461 : f32
    %26 = vector.broadcast %cst_20 : f32 to vector<16x128xf32>
    %27 = arith.mulf %25, %26 : vector<16x128xf32>
    %c0_21 = arith.constant 0 : index
    %c0_22 = arith.constant 0 : index
    %c0_23 = arith.constant 0 : index
    %c0_24 = arith.constant 0 : index
    %28 = vector.load %arg8[%c0_21, %c0_22, %c0_23, %c0_24] : memref<1x1x16x128xf32, #tpu.memory_space<vmem>>, vector<1x1x16x128xf32>
    %29 = vector.shape_cast %28 : vector<1x1x16x128xf32> to vector<16x128xf32>
    %30 = arith.addf %27, %29 : vector<16x128xf32>
    %cst_25 = arith.constant dense<0xFF800000> : vector<16xf32>
    %31 = vector.multi_reduction <maximumf>, %30, %cst_25 [1] : vector<16x128xf32> to vector<16xf32>
    %32 = vector.shape_cast %31 : vector<16xf32> to vector<16x1xf32>
    %33 = vector.broadcast %32 : vector<16x1xf32> to vector<16x128xf32>
    %34 = arith.subf %30, %33 : vector<16x128xf32>
    %35 = math.exp %34 : vector<16x128xf32>
    %cst_26 = arith.constant dense<0.000000e+00> : vector<16xf32>
    %36 = vector.multi_reduction <add>, %35, %cst_26 [1] : vector<16x128xf32> to vector<16xf32>
    %37 = vector.shape_cast %36 : vector<16xf32> to vector<16x1xf32>
    %38 = tpu.reciprocal %37 : vector<16x1xf32> -> vector<16x1xf32>
    %39 = vector.broadcast %38 : vector<16x1xf32> to vector<16x128xf32>
    %40 = arith.mulf %35, %39 : vector<16x128xf32>
    %cst_27 = arith.constant dense<0.000000e+00> : vector<16x128xf32>
    %41 = tpu.matmul %40, %24, %cst_27 {dimension_numbers = #tpu.dot_dimension_numbers<[1], [0], [0], [1], [0, 0, 1, 1], [], []>} : vector<16x128xf32>, vector<128x128xf32>, vector<16x128xf32> -> vector<16x128xf32>
    %c0_28 = arith.constant 0 : index
    %c0_29 = arith.constant 0 : index
    %c0_30 = arith.constant 0 : index
    %c0_31 = arith.constant 0 : index
    %42 = vector.load %arg9[%c0_28, %c0_29, %c0_30, %c0_31] : memref<1x1x16x1xf32, #tpu.memory_space<vmem>>, vector<1x1x16x1xf32>
    %43 = vector.shape_cast %42 : vector<1x1x16x1xf32> to vector<16x1xf32>
    %44 = vector.broadcast %43 : vector<16x1xf32> to vector<16x128xf32>
    %45 = arith.mulf %41, %44 : vector<16x128xf32>
    %c0_32 = arith.constant 0 : index
    %c0_33 = arith.constant 0 : index
    %46 = vector.load %arg12[%c0_32, %c0_33] : memref<16x256xf32, #tpu.memory_space<vmem>>, vector<16x256xf32>
    %c0_34 = arith.constant 0 : index
    %c0_35 = arith.constant 0 : index
    %c0_36 = arith.constant 0 : index
    %47 = vector.load %arg10[%c0_34, %c0_35, %c0_36] : memref<1x128x256xf32, #tpu.memory_space<vmem>>, vector<1x128x256xf32>
    %48 = vector.shape_cast %47 : vector<1x128x256xf32> to vector<128x256xf32>
    %cst_37 = arith.constant dense<0.000000e+00> : vector<16x256xf32>
    %49 = tpu.matmul %45, %48, %cst_37 {dimension_numbers = #tpu.dot_dimension_numbers<[1], [0], [0], [1], [0, 0, 1, 1], [], []>} : vector<16x128xf32>, vector<128x256xf32>, vector<16x256xf32> -> vector<16x256xf32>
    %50 = arith.addf %46, %49 : vector<16x256xf32>
    %c0_38 = arith.constant 0 : index
    %c0_39 = arith.constant 0 : index
    %51 = vector.load %arg12[%c0_38, %c0_39] : memref<16x256xf32, #tpu.memory_space<vmem>>, vector<16x256xf32>
    tpu.vector_store %arg12[%c0_38, %c0_39], %50 {strides = array<i32>} : memref<16x256xf32, #tpu.memory_space<vmem>>, vector<16x256xf32>,
    %c3_i32 = arith.constant 3 : i32
    %52 = arith.cmpi eq, %arg2, %c3_i32 : i32
    %53 = arith.extui %52 : i1 to i32
    %c0_i32_40 = arith.constant 0 : i32
    %54 = arith.cmpi ne, %53, %c0_i32_40 : i32
    scf.if %54 {
      %c0_41 = arith.constant 0 : index
      %c0_42 = arith.constant 0 : index
      %55 = vector.load %arg12[%c0_41, %c0_42] : memref<16x256xf32, #tpu.memory_space<vmem>>, vector<16x256xf32>
      %c0_43 = arith.constant 0 : index
      %c0_44 = arith.constant 0 : index
      %c0_45 = arith.constant 0 : index
      %56 = vector.load %arg11[%c0_43, %c0_44, %c0_45] : memref<1x16x256xf32, #tpu.memory_space<vmem>>, vector<1x16x256xf32>
      %57 = vector.shape_cast %56 : vector<1x16x256xf32> to vector<16x256xf32>
      %58 = vector.shape_cast %55 : vector<16x256xf32> to vector<1x16x256xf32>
      tpu.vector_store %arg11[%c0_43, %c0_44, %c0_45], %58 {strides = array<i32>} : memref<1x16x256xf32, #tpu.memory_space<vmem>>, vector<1x16x256xf32>,
    } else {
    }
    return
  }
  func.func @transform_0(%arg0: i32, %arg1: i32, %arg2: i32) -> (i32, i32, i32) {
    %c0_i32 = arith.constant 0 : i32
    %c0_i32_0 = arith.constant 0 : i32
    return %arg0, %arg1, %c0_i32 : i32, i32, i32
  }
  func.func @transform_1(%arg0: i32, %arg1: i32, %arg2: i32) -> (i32, i32, i32) {
    %c0_i32 = arith.constant 0 : i32
    %c0_i32_0 = arith.constant 0 : i32
    %c0_i32_1 = arith.constant 0 : i32
    return %arg2, %c0_i32, %c0_i32_0 : i32, i32, i32
  }
  func.func @transform_2(%arg0: i32, %arg1: i32, %arg2: i32) -> (i32, i32) {
    %c0_i32 = arith.constant 0 : i32
    %c0_i32_0 = arith.constant 0 : i32
    %c0_i32_1 = arith.constant 0 : i32
    return %c0_i32, %c0_i32_0 : i32, i32
  }
  func.func @transform_3(%arg0: i32, %arg1: i32, %arg2: i32) -> (i32, i32, i32, i32) {
    %c0_i32 = arith.constant 0 : i32
    %c0_i32_0 = arith.constant 0 : i32
    %c0_i32_1 = arith.constant 0 : i32
    return %arg0, %arg2, %c0_i32, %c0_i32_0 : i32, i32, i32, i32
  }
  func.func @transform_4(%arg0: i32, %arg1: i32, %arg2: i32) -> (i32, i32, i32, i32) {
    %c0_i32 = arith.constant 0 : i32
    %c0_i32_0 = arith.constant 0 : i32
    %c0_i32_1 = arith.constant 0 : i32
    return %arg0, %arg2, %c0_i32, %c0_i32_0 : i32, i32, i32, i32
  }
  func.func @transform_5(%arg0: i32, %arg1: i32, %arg2: i32) -> (i32, i32, i32, i32) {
    %c0_i32 = arith.constant 0 : i32
    %c0_i32_0 = arith.constant 0 : i32
    %c0_i32_1 = arith.constant 0 : i32
    return %arg0, %c0_i32, %arg1, %c0_i32_0 : i32, i32, i32, i32
  }
  func.func @transform_6(%arg0: i32, %arg1: i32, %arg2: i32) -> (i32, i32, i32, i32) {
    %c0_i32 = arith.constant 0 : i32
    %c0_i32_0 = arith.constant 0 : i32
    %c0_i32_1 = arith.constant 0 : i32
    return %arg0, %c0_i32, %arg1, %c0_i32_0 : i32, i32, i32, i32
  }
  func.func @transform_7(%arg0: i32, %arg1: i32, %arg2: i32) -> (i32, i32, i32) {
    %c0_i32 = arith.constant 0 : i32
    %c0_i32_0 = arith.constant 0 : i32
    %c0_i32_1 = arith.constant 0 : i32
    return %arg2, %c0_i32, %c0_i32_0 : i32, i32, i32
  }
  func.func @transform_8(%arg0: i32, %arg1: i32, %arg2: i32) -> (i32, i32, i32) {
    %c0_i32 = arith.constant 0 : i32
    %c0_i32_0 = arith.constant 0 : i32
    return %arg0, %arg1, %c0_i32 : i32, i32, i32
  }
}

</mosaic_0001>

<llo_original>
// kernel: tpu_custom_call.1
$region0: #{tpu_custom_call.1}
  #allocation0 [shape = 'u32[]', space=smem, size = 0x4, offset = 0x4, fixed_abs, tag = 'smem constant byte address 0x4 - core index']
  #allocation1 [shape = 'u32[144,128]{1,0:T(1,128)}', space=vmem, size = 0x12000, scoped, tag = 'internal scratch']
  #allocation2 [shape = 'f32[16,256]{1,0:T(8,128)}', space=vmem, size = 0x4000, scoped, tag = 'scratch operand']
  %s0 = inlined_call_operand.hbm [shape: f32[2,16,256], index: 0, kind: input, shape index: {}]
  %s1 = inlined_call_operand.hbm [shape: f32[4,256,128], index: 1, kind: input, shape index: {}]
  %s2 = inlined_call_operand.vmem [shape: f32[1,128], index: 2, kind: input, shape index: {}]
  %s3 = inlined_call_operand.hbm [shape: f32[2,4,128,128], index: 3, kind: input, shape index: {}]
  %s4 = inlined_call_operand.hbm [shape: f32[2,4,128,128], index: 4, kind: input, shape index: {}]
  %s5 = inlined_call_operand.vmem [shape: f32[2,1,16,128], index: 5, kind: input, shape index: {}]
  %s6 = inlined_call_operand.vmem [shape: f32[2,1,16,1], index: 6, kind: input, shape index: {}]
  %s7 = inlined_call_operand.hbm [shape: f32[4,128,256], index: 7, kind: input, shape index: {}]
  %s8 = inlined_call_operand.hbm [shape: f32[2,16,256], index: 8, kind: output, shape index: {}]
  %s9 = sld [smem:[#allocation0]]
  $region93: #{tpu_custom_call.1} parent=0
    _
  %s11 = ssub.s32 1, %s9
  %s12 = scalar_select 0, %s11, %s9
  $region1: #{tpu_custom_call.1} parent=0
    #allocation3 [shape = 'u8[32768]{0}', space=vmem, size = 0x8000, scoped, tag = 'input window, operand 0']
    #allocation4 [shape = 's32[2]{0}', space=sflag, size = 0x8, scoped, tag = 'scoped memory for tpu_custom_call.1']
    #allocation5 [shape = 's32[2]{0}', space=sflag, size = 0x8, scoped, tag = 'scoped memory for tpu_custom_call.1']
    #allocation6 [shape = 'u8[262144]{0}', space=vmem, size = 0x40000, scoped, tag = 'input window, operand 1']
    #allocation7 [shape = 's32[2]{0}', space=sflag, size = 0x8, scoped, tag = 'scoped memory for tpu_custom_call.1']
    #allocation8 [shape = 'u8[131072]{0}', space=vmem, size = 0x20000, scoped, tag = 'input window, operand 3']
    #allocation9 [shape = 'u8[131072]{0}', space=vmem, size = 0x20000, scoped, tag = 'input window, operand 4']
    #allocation10 [shape = 's32[2]{0}', space=sflag, size = 0x8, scoped, tag = 'scoped memory for tpu_custom_call.1']
    #allocation11 [shape = 'u8[262144]{0}', space=vmem, size = 0x40000, scoped, tag = 'input window, operand 7']
    #allocation12 [shape = 'u8[32768]{0}', space=vmem, size = 0x8000, scoped, tag = 'output window, operand 0']
    %13 = vsyncpa [#allocation4], 0
    %s14 = scalar_lea.sflag [#allocation4], 1
    %15 = vsyncpa %s14, 0
    %16 = vsyncpa [#allocation7], 0
    %s17 = scalar_lea.sflag [#allocation7], 1
    %18 = vsyncpa %s17, 0
    %19 = vsyncpa [#allocation10], 0
    %s20 = scalar_lea.sflag [#allocation10], 1
    %21 = vsyncpa %s20, 0
    %22 = vsyncpa [#allocation5], 0
    %s23 = scalar_lea.sflag [#allocation5], 1
    %24 = vsyncpa %s23, 0
    loop: start=0, step=1, limit=10
    $region2: #{tpu_custom_call.1} parent=1 // loop_pre_header
      _
    $region3: #{tpu_custom_call.1} parent=1 // loop_header
      %s26 = sphi 0, %s30
      %p27 = scmp.ge.s32.totalorder %s26, 10
      %s33 = sphi 0, %s52
      %s34 = sphi 0, %s48
      %s35 = sphi 0, %s44
      %s36 = sphi 0, %s33
      %s37 = sphi 0, %s34
      %s38 = sphi 0, %s35
      %s39 = sphi 0, %s36
      %s40 = sphi 0, %s37
      %s41 = sphi 0, %s38
      %s57 = sphi 0, %s59
      %s60 = sphi 0, %s57
      %s61 = sphi 0, %s60
      %s77 = sphi 0, %s61
      %s83 = sphi 0, %s85
      %s86 = sphi 0, %s83
      %s87 = sphi 0, %s86
      %s103 = sphi 0, %s87
      %s107 = sphi 0, %s107
      %s109 = sphi 0, %s107
      %s110 = sphi 0, %s109
      %s124 = sphi 0, %s110
      %s132 = sphi 0, %s134
      %s135 = sphi 0, %s132
      %s136 = sphi 0, %s135
      %s152 = sphi 0, %s136
      %s160 = sphi 0, %s162
      %s163 = sphi 0, %s160
      %s164 = sphi 0, %s163
      %s180 = sphi 0, %s164
      %s188 = sphi 0, %s190
      %s191 = sphi 0, %s188
      %s192 = sphi 0, %s191
      %s208 = sphi 0, %s192
      %s216 = sphi 0, %s218
      %s219 = sphi 0, %s216
      %s220 = sphi 0, %s219
      %s236 = sphi 0, %s220
      %s242 = sphi 0, %s244
      %s245 = sphi 0, %s242
      %s246 = sphi 0, %s245
      %s262 = sphi 0, %s246
      %s270 = sphi 0, %s272
      %s273 = sphi 0, %s270
      %s274 = sphi 0, %s273
      %s290 = sphi 0, %s274
    $region4: #{tpu_custom_call.1} parent=1 // loop_header_branch
      %29 = sbr.rel (%p27) target = $region8
    $region5: #{tpu_custom_call.1} parent=1 // loop_body
      %s31 = ssub.s32 %s26, 1
      %s32 = ssub.s32 %s26, 2
      %s42 = sadd.s32 1, %s35
      %p43 = scmp.ge.s32.totalorder %s42, 4
      %s44 = scalar_select %p43, 0, %s42
      %s45 = sadd.s32 1, %s34
      %s46 = scalar_select %p43, %s45, %s34
      %p47 = scmp.ge.s32.totalorder %s46, 1
      %s48 = scalar_select %p47, 0, %s46
      %s49 = sadd.s32 1, %s33
      %s50 = scalar_select %p47, %s49, %s33
      %p51 = scmp.ge.s32.totalorder %s50, 2
      %s52 = scalar_select %p51, 0, %s50
      %s53 = ssub.s32 %s33, %s52
      %s54 = ssub.s32 %s34, %s48
      %s55 = sor.u32 %s53, %s54
      %p56 = scmp.eq.s32.totalorder %s55, 0
      %s58 = sadd.s32 %s57, 1
      %s59 = scalar_select %p56, %s57, %s58
      %p62 = pneg %p56
      %p63 = scmp.eq.s32.totalorder %s26, 7
      %p64 = por %p62, %p63
      %p65 = scmp.ne.s32.totalorder %s57, %s60
      %p66 = scmp.eq.s32.totalorder %s26, 0
      %p67 = por %p65, %p66
      %p68 = scmp.ne.s32.totalorder %s57, %s60
      %p69 = scmp.eq.s32.totalorder %s31, 7
      %p70 = por %p68, %p69
      %p71 = scmp.ne.s32.totalorder %s60, %s61
      %p72 = scmp.eq.s32.totalorder %s31, 0
      %p73 = por %p71, %p72
      %p74 = scmp.ne.s32.totalorder %s60, %s61
      %p75 = scmp.eq.s32.totalorder %s32, 7
      %p76 = por %p74, %p75
      %p78 = scmp.ne.s32.totalorder %s61, %s77
      %p79 = scmp.eq.s32.totalorder %s32, 0
      %p80 = por %p78, %p79
      %s81 = ssub.s32 %s35, %s44
      %p82 = scmp.eq.s32.totalorder %s81, 0
      %s84 = sadd.s32 %s83, 1
      %s85 = scalar_select %p82, %s83, %s84
      %p88 = pneg %p82
      %p89 = scmp.eq.s32.totalorder %s26, 7
      %p90 = por %p88, %p89
      %p91 = scmp.ne.s32.totalorder %s83, %s86
      %p92 = scmp.eq.s32.totalorder %s26, 0
      %p93 = por %p91, %p92
      %p94 = scmp.ne.s32.totalorder %s83, %s86
      %p95 = scmp.eq.s32.totalorder %s31, 7
      %p96 = por %p94, %p95
      %p97 = scmp.ne.s32.totalorder %s86, %s87
      %p98 = scmp.eq.s32.totalorder %s31, 0
      %p99 = por %p97, %p98
      %p100 = scmp.ne.s32.totalorder %s86, %s87
      %p101 = scmp.eq.s32.totalorder %s32, 7
      %p102 = por %p100, %p101
      %p104 = scmp.ne.s32.totalorder %s87, %s103
      %p105 = scmp.eq.s32.totalorder %s32, 0
      %p106 = por %p104, %p105
      %s108 = sadd.s32 %s107, 1
      %p111 = scmp.eq.s32.totalorder %s26, 7
      %p112 = scmp.ne.s32.totalorder %s107, %s109
      %p113 = scmp.eq.s32.totalorder %s26, 0
      %p114 = por %p112, %p113
      %p115 = scmp.ne.s32.totalorder %s107, %s109
      %p116 = scmp.eq.s32.totalorder %s31, 7
      %p117 = por %p115, %p116
      %p118 = scmp.ne.s32.totalorder %s109, %s110
      %p119 = scmp.eq.s32.totalorder %s31, 0
      %p120 = por %p118, %p119
      %p121 = scmp.ne.s32.totalorder %s109, %s110
      %p122 = scmp.eq.s32.totalorder %s32, 7
      %p123 = por %p121, %p122
      %p125 = scmp.ne.s32.totalorder %s110, %s124
      %p126 = scmp.eq.s32.totalorder %s32, 0
      %p127 = por %p125, %p126
      %s128 = ssub.s32 %s33, %s52
      %s129 = ssub.s32 %s35, %s44
      %s130 = sor.u32 %s128, %s129
      %p131 = scmp.eq.s32.totalorder %s130, 0
      %s133 = sadd.s32 %s132, 1
      %s134 = scalar_select %p131, %s132, %s133
      %p137 = pneg %p131
      %p138 = scmp.eq.s32.totalorder %s26, 7
      %p139 = por %p137, %p138
      %p140 = scmp.ne.s32.totalorder %s132, %s135
      %p141 = scmp.eq.s32.totalorder %s26, 0
      %p142 = por %p140, %p141
      %p143 = scmp.ne.s32.totalorder %s132, %s135
      %p144 = scmp.eq.s32.totalorder %s31, 7
      %p145 = por %p143, %p144
      %p146 = scmp.ne.s32.totalorder %s135, %s136
      %p147 = scmp.eq.s32.totalorder %s31, 0
      %p148 = por %p146, %p147
      %p149 = scmp.ne.s32.totalorder %s135, %s136
      %p150 = scmp.eq.s32.totalorder %s32, 7
      %p151 = por %p149, %p150
      %p153 = scmp.ne.s32.totalorder %s136, %s152
      %p154 = scmp.eq.s32.totalorder %s32, 0
      %p155 = por %p153, %p154
      %s156 = ssub.s32 %s33, %s52
      %s157 = ssub.s32 %s35, %s44
      %s158 = sor.u32 %s156, %s157
      %p159 = scmp.eq.s32.totalorder %s158, 0
      %s161 = sadd.s32 %s160, 1
      %s162 = scalar_select %p159, %s160, %s161
      %p165 = pneg %p159
      %p166 = scmp.eq.s32.totalorder %s26, 7
      %p167 = por %p165, %p166
      %p168 = scmp.ne.s32.totalorder %s160, %s163
      %p169 = scmp.eq.s32.totalorder %s26, 0
      %p170 = por %p168, %p169
      %p171 = scmp.ne.s32.totalorder %s160, %s163
      %p172 = scmp.eq.s32.totalorder %s31, 7
      %p173 = por %p171, %p172
      %p174 = scmp.ne.s32.totalorder %s163, %s164
      %p175 = scmp.eq.s32.totalorder %s31, 0
      %p176 = por %p174, %p175
      %p177 = scmp.ne.s32.totalorder %s163, %s164
      %p178 = scmp.eq.s32.totalorder %s32, 7
      %p179 = por %p177, %p178
      %p181 = scmp.ne.s32.totalorder %s164, %s180
      %p182 = scmp.eq.s32.totalorder %s32, 0
      %p183 = por %p181, %p182
      %s184 = ssub.s32 %s33, %s52
      %s185 = ssub.s32 %s34, %s48
      %s186 = sor.u32 %s184, %s185
      %p187 = scmp.eq.s32.totalorder %s186, 0
      %s189 = sadd.s32 %s188, 1
      %s190 = scalar_select %p187, %s188, %s189
      %p193 = pneg %p187
      %p194 = scmp.eq.s32.totalorder %s26, 7
      %p195 = por %p193, %p194
      %p196 = scmp.ne.s32.totalorder %s188, %s191
      %p197 = scmp.eq.s32.totalorder %s26, 0
      %p198 = por %p196, %p197
      %p199 = scmp.ne.s32.totalorder %s188, %s191
      %p200 = scmp.eq.s32.totalorder %s31, 7
      %p201 = por %p199, %p200
      %p202 = scmp.ne.s32.totalorder %s191, %s192
      %p203 = scmp.eq.s32.totalorder %s31, 0
      %p204 = por %p202, %p203
      %p205 = scmp.ne.s32.totalorder %s191, %s192
      %p206 = scmp.eq.s32.totalorder %s32, 7
      %p207 = por %p205, %p206
      %p209 = scmp.ne.s32.totalorder %s192, %s208
      %p210 = scmp.eq.s32.totalorder %s32, 0
      %p211 = por %p209, %p210
      %s212 = ssub.s32 %s33, %s52
      %s213 = ssub.s32 %s34, %s48
      %s214 = sor.u32 %s212, %s213
      %p215 = scmp.eq.s32.totalorder %s214, 0
      %s217 = sadd.s32 %s216, 1
      %s218 = scalar_select %p215, %s216, %s217
      %p221 = pneg %p215
      %p222 = scmp.eq.s32.totalorder %s26, 7
      %p223 = por %p221, %p222
      %p224 = scmp.ne.s32.totalorder %s216, %s219
      %p225 = scmp.eq.s32.totalorder %s26, 0
      %p226 = por %p224, %p225
      %p227 = scmp.ne.s32.totalorder %s216, %s219
      %p228 = scmp.eq.s32.totalorder %s31, 7
      %p229 = por %p227, %p228
      %p230 = scmp.ne.s32.totalorder %s219, %s220
      %p231 = scmp.eq.s32.totalorder %s31, 0
      %p232 = por %p230, %p231
      %p233 = scmp.ne.s32.totalorder %s219, %s220
      %p234 = scmp.eq.s32.totalorder %s32, 7
      %p235 = por %p233, %p234
      %p237 = scmp.ne.s32.totalorder %s220, %s236
      %p238 = scmp.eq.s32.totalorder %s32, 0
      %p239 = por %p237, %p238
      %s240 = ssub.s32 %s35, %s44
      %p241 = scmp.eq.s32.totalorder %s240, 0
      %s243 = sadd.s32 %s242, 1
      %s244 = scalar_select %p241, %s242, %s243
      %p247 = pneg %p241
      %p248 = scmp.eq.s32.totalorder %s26, 7
      %p249 = por %p247, %p248
      %p250 = scmp.ne.s32.totalorder %s242, %s245
      %p251 = scmp.eq.s32.totalorder %s26, 0
      %p252 = por %p250, %p251
      %p253 = scmp.ne.s32.totalorder %s242, %s245
      %p254 = scmp.eq.s32.totalorder %s31, 7
      %p255 = por %p253, %p254
      %p256 = scmp.ne.s32.totalorder %s245, %s246
      %p257 = scmp.eq.s32.totalorder %s31, 0
      %p258 = por %p256, %p257
      %p259 = scmp.ne.s32.totalorder %s245, %s246
      %p260 = scmp.eq.s32.totalorder %s32, 7
      %p261 = por %p259, %p260
      %p263 = scmp.ne.s32.totalorder %s246, %s262
      %p264 = scmp.eq.s32.totalorder %s32, 0
      %p265 = por %p263, %p264
      %s266 = ssub.s32 %s33, %s52
      %s267 = ssub.s32 %s34, %s48
      %s268 = sor.u32 %s266, %s267
      %p269 = scmp.eq.s32.totalorder %s268, 0
      %s271 = sadd.s32 %s270, 1
      %s272 = scalar_select %p269, %s270, %s271
      %p275 = pneg %p269
      %p276 = scmp.eq.s32.totalorder %s26, 7
      %p277 = por %p275, %p276
      %p278 = scmp.ne.s32.totalorder %s270, %s273
      %p279 = scmp.eq.s32.totalorder %s26, 0
      %p280 = por %p278, %p279
      %p281 = scmp.ne.s32.totalorder %s270, %s273
      %p282 = scmp.eq.s32.totalorder %s31, 7
      %p283 = por %p281, %p282
      %p284 = scmp.ne.s32.totalorder %s273, %s274
      %p285 = scmp.eq.s32.totalorder %s31, 0
      %p286 = por %p284, %p285
      %p287 = scmp.ne.s32.totalorder %s273, %s274
      %p288 = scmp.eq.s32.totalorder %s32, 7
      %p289 = por %p287, %p288
      %p291 = scmp.ne.s32.totalorder %s274, %s290
      %p292 = scmp.eq.s32.totalorder %s32, 0
      %p293 = por %p291, %p292
      %p294 = scmp.le.s32.totalorder 1, %s26
      %p295 = scmp.lt.s32.totalorder %s26, 9
      %p296 = pnand %p294, %p295
      %p297 = pneg %p296
      // Predicated region
      $region9: #{tpu_custom_call.1} parent=5 // pred_check
        _
      $region10: #{tpu_custom_call.1} parent=5 // pred_check_branch
        %299 = sbr.rel (%p296) target = $region12
      $region11: #{tpu_custom_call.1} parent=5 // pred_region
        %s300 = ssub.s32 %s26, 1
        // Predicated region
        $region13: #{tpu_custom_call.1} parent=11 // pred_check
          %p301 = pneg %p120
        $region14: #{tpu_custom_call.1} parent=11 // pred_check_branch
          %303 = sbr.rel (%p301) target = $region16
        $region15: #{tpu_custom_call.1} parent=11 // pred_region
          _
        $region16: #{tpu_custom_call.1} parent=11 // pred_fallthru
          _
      $region12: #{tpu_custom_call.1} parent=5 // pred_fallthru
        _
      %p304 = scmp.lt.s32.totalorder %s26, 8
      // Predicated region
      $region17: #{tpu_custom_call.1} parent=5 // pred_check
        %p305 = pneg %p304
      $region18: #{tpu_custom_call.1} parent=5 // pred_check_branch
        %307 = sbr.rel (%p305) target = $region20
      $region19: #{tpu_custom_call.1} parent=5 // pred_region
        // Predicated region
        $region21: #{tpu_custom_call.1} parent=19 // pred_check
          %p308 = pneg %p67
        $region22: #{tpu_custom_call.1} parent=19 // pred_check_branch
          %310 = sbr.rel (%p308) target = $region24
        $region23: #{tpu_custom_call.1} parent=19 // pred_region
          %s311 = sand.u32 %s57, 1
          %s312 = scalar_lea.sflag [#allocation4], %s311
          %s313 = sand.u32 %s57, 1
          %s314 = smul.addr %s313, 32
          %s315 = scalar_lea.vmem [#allocation3], %s314
          %s316 = smul.u32 2, %s34
          %s318 = ssub.s32 512, 512
          %319 = vsyncadd %s312, %s318
          %s320 = smul.addr %s316, 2
          %s321 = smul.addr %s33, 4
          %s322 = sadd.s32 %s320, %s321
          %s323 = smul.addr %s322, 128
          %s324 = scalar_lea.hbm %s0, %s323
          %s325 = sshll.u32 %s315, 4
          %s326 = int_to_ptr.vmem [resolvable:$true] %s325
          %331 = dma.hbm_to_vmem [thread:$0]  %s324, 512, %s326, %s312, 256, 256, 16
        $region24: #{tpu_custom_call.1} parent=19 // pred_fallthru
          _
        // Predicated region
        $region25: #{tpu_custom_call.1} parent=19 // pred_check
          %p332 = pneg %p93
        $region26: #{tpu_custom_call.1} parent=19 // pred_check_branch
          %334 = sbr.rel (%p332) target = $region28
        $region27: #{tpu_custom_call.1} parent=19 // pred_region
          %s335 = sand.u32 %s26, 1
          %s336 = scalar_lea.sflag [#allocation7], %s335
          %s337 = sand.u32 %s83, 1
          %s338 = smul.addr %s337, 256
          %s339 = scalar_lea.vmem [#allocation6], %s338
          %s341 = ssub.s32 4096, 4096
          %342 = vsyncadd %s336, %s341
          %s343 = smul.addr %s35, 32
          %s344 = smul.addr %s343, 128
          %s345 = scalar_lea.hbm %s1, %s344
          %s346 = sshll.u32 %s339, 4
          %s347 = int_to_ptr.vmem [resolvable:$true] %s346
          %352 = dma.hbm_to_vmem [thread:$0]  %s345, 4096, %s347, %s336, 128, 128, 8
        $region28: #{tpu_custom_call.1} parent=19 // pred_fallthru
          _
        // Predicated region
        $region29: #{tpu_custom_call.1} parent=19 // pred_check
          %p353 = pneg %p142
        $region30: #{tpu_custom_call.1} parent=19 // pred_check_branch
          %355 = sbr.rel (%p353) target = $region32
        $region31: #{tpu_custom_call.1} parent=19 // pred_region
          %s356 = sand.u32 %s26, 1
          %s357 = scalar_lea.sflag [#allocation7], %s356
          %s358 = sand.u32 %s132, 1
          %s359 = smul.addr %s358, 128
          %s360 = scalar_lea.vmem [#allocation8], %s359
          %s362 = ssub.s32 2048, 2048
          %363 = vsyncadd %s357, %s362
          %s364 = smul.addr %s35, 16
          %s365 = smul.addr %s33, 64
          %s366 = sadd.s32 %s364, %s365
          %s367 = smul.addr %s366, 128
          %s368 = scalar_lea.hbm %s3, %s367
          %s369 = sshll.u32 %s360, 4
          %s370 = int_to_ptr.vmem [resolvable:$true] %s369
          %375 = dma.hbm_to_vmem [thread:$0]  %s368, 2048, %s370, %s357, 128, 128, 8
        $region32: #{tpu_custom_call.1} parent=19 // pred_fallthru
          _
        // Predicated region
        $region33: #{tpu_custom_call.1} parent=19 // pred_check
          %p376 = pneg %p170
        $region34: #{tpu_custom_call.1} parent=19 // pred_check_branch
          %378 = sbr.rel (%p376) target = $region36
        $region35: #{tpu_custom_call.1} parent=19 // pred_region
          %s379 = sand.u32 %s26, 1
          %s380 = scalar_lea.sflag [#allocation10], %s379
          %s381 = sand.u32 %s160, 1
          %s382 = smul.addr %s381, 128
          %s383 = scalar_lea.vmem [#allocation9], %s382
          %s385 = ssub.s32 2048, 2048
          %386 = vsyncadd %s380, %s385
          %s387 = smul.addr %s35, 16
          %s388 = smul.addr %s33, 64
          %s389 = sadd.s32 %s387, %s388
          %s390 = smul.addr %s389, 128
          %s391 = scalar_lea.hbm %s4, %s390
          %s392 = sshll.u32 %s383, 4
          %s393 = int_to_ptr.vmem [resolvable:$true] %s392
          %398 = dma.hbm_to_vmem [thread:$0]  %s391, 2048, %s393, %s380, 128, 128, 8
        $region36: #{tpu_custom_call.1} parent=19 // pred_fallthru
          _
        // Predicated region
        $region37: #{tpu_custom_call.1} parent=19 // pred_check
          %p399 = pneg %p198
        $region38: #{tpu_custom_call.1} parent=19 // pred_check_branch
          %401 = sbr.rel (%p399) target = $region40
        $region39: #{tpu_custom_call.1} parent=19 // pred_region
          %s402 = smul.u32 2, %s34
          %p403 = scmp.lt.s32.totalorder %s33, 1
          %s404 = scalar_select %p403, %s33, 1
          %p405 = scmp.lt.s32.totalorder %s402, 1
          %s406 = scalar_select %p405, %s402, 1
          %s407 = smul.addr %s404, 2
          %s408 = sadd.s32 %s406, %s407
          %s409 = smul.addr %s408, 8
          %s410 = scalar_lea.vmem %s5, %s409
          %s411 = smul.u32 2, %s34
        $region40: #{tpu_custom_call.1} parent=19 // pred_fallthru
          _
        // Predicated region
        $region41: #{tpu_custom_call.1} parent=19 // pred_check
          %p412 = pneg %p226
        $region42: #{tpu_custom_call.1} parent=19 // pred_check_branch
          %414 = sbr.rel (%p412) target = $region44
        $region43: #{tpu_custom_call.1} parent=19 // pred_region
          %s415 = smul.u32 2, %s34
          %p416 = scmp.lt.s32.totalorder %s33, 1
          %s417 = scalar_select %p416, %s33, 1
          %p418 = scmp.lt.s32.totalorder %s415, 1
          %s419 = scalar_select %p418, %s415, 1
          %s420 = smul.addr %s417, 2
          %s421 = sadd.s32 %s419, %s420
          %s422 = smul.addr %s421, 8
          %s423 = scalar_lea.vmem %s6, %s422
          %s424 = smul.u32 2, %s34
        $region44: #{tpu_custom_call.1} parent=19 // pred_fallthru
          _
        // Predicated region
        $region45: #{tpu_custom_call.1} parent=19 // pred_check
          %p425 = pneg %p252
        $region46: #{tpu_custom_call.1} parent=19 // pred_check_branch
          %427 = sbr.rel (%p425) target = $region48
        $region47: #{tpu_custom_call.1} parent=19 // pred_region
          %s428 = sand.u32 %s26, 1
          %s429 = scalar_lea.sflag [#allocation10], %s428
          %s430 = sand.u32 %s242, 1
          %s431 = smul.addr %s430, 256
          %s432 = scalar_lea.vmem [#allocation11], %s431
          %s434 = ssub.s32 4096, 4096
          %435 = vsyncadd %s429, %s434
          %s436 = smul.addr %s35, 32
          %s437 = smul.addr %s436, 128
          %s438 = scalar_lea.hbm %s7, %s437
          %s439 = sshll.u32 %s432, 4
          %s440 = int_to_ptr.vmem [resolvable:$true] %s439
          %445 = dma.hbm_to_vmem [thread:$0]  %s438, 4096, %s440, %s429, 256, 256, 16
        $region48: #{tpu_custom_call.1} parent=19 // pred_fallthru
          _
      $region20: #{tpu_custom_call.1} parent=5 // pred_fallthru
        _
      %p446 = scmp.le.s32.totalorder 1, %s26
      %p447 = scmp.lt.s32.totalorder %s26, 9
      %p448 = pnand %p446, %p447
      %p449 = pneg %p448
      // Predicated region
      $region49: #{tpu_custom_call.1} parent=5 // pred_check
        _
      $region50: #{tpu_custom_call.1} parent=5 // pred_check_branch
        %451 = sbr.rel (%p448) target = $region52
      $region51: #{tpu_custom_call.1} parent=5 // pred_region
        %s452 = ssub.s32 %s26, 1
        %s453 = sand.u32 %s60, 1
        %s454 = scalar_lea.sflag [#allocation4], %s453
        %s455 = sand.u32 %s60, 1
        %s456 = smul.addr %s455, 32
        %s457 = scalar_lea.vmem [#allocation3], %s456
        // Predicated region
        $region53: #{tpu_custom_call.1} parent=51 // pred_check
          %p458 = pneg %p73
        $region54: #{tpu_custom_call.1} parent=51 // pred_check_branch
          %460 = sbr.rel (%p458) target = $region56
        $region55: #{tpu_custom_call.1} parent=51 // pred_region
          %461 = dma.done %s454, 512
        $region56: #{tpu_custom_call.1} parent=51 // pred_fallthru
          _
        %s462 = sand.u32 %s31, 1
        %s463 = scalar_lea.sflag [#allocation7], %s462
        %s464 = sand.u32 %s86, 1
        %s465 = smul.addr %s464, 256
        %s466 = scalar_lea.vmem [#allocation6], %s465
        // Predicated region
        $region57: #{tpu_custom_call.1} parent=51 // pred_check
          %p467 = pneg %p99
        $region58: #{tpu_custom_call.1} parent=51 // pred_check_branch
          %469 = sbr.rel (%p467) target = $region60
        $region59: #{tpu_custom_call.1} parent=51 // pred_region
          %470 = dma.done %s463, 4096
        $region60: #{tpu_custom_call.1} parent=51 // pred_fallthru
          _
        %s471 = sand.u32 %s31, 1
        %s472 = scalar_lea.sflag [#allocation7], %s471
        %s473 = sand.u32 %s135, 1
        %s474 = smul.addr %s473, 128
        %s475 = scalar_lea.vmem [#allocation8], %s474
        // Predicated region
        $region61: #{tpu_custom_call.1} parent=51 // pred_check
          %p476 = pneg %p148
        $region62: #{tpu_custom_call.1} parent=51 // pred_check_branch
          %478 = sbr.rel (%p476) target = $region64
        $region63: #{tpu_custom_call.1} parent=51 // pred_region
          %479 = dma.done %s472, 2048
        $region64: #{tpu_custom_call.1} parent=51 // pred_fallthru
          _
        %s480 = sand.u32 %s31, 1
        %s481 = scalar_lea.sflag [#allocation10], %s480
        %s482 = sand.u32 %s163, 1
        %s483 = smul.addr %s482, 128
        %s484 = scalar_lea.vmem [#allocation9], %s483
        // Predicated region
        $region65: #{tpu_custom_call.1} parent=51 // pred_check
          %p485 = pneg %p176
        $region66: #{tpu_custom_call.1} parent=51 // pred_check_branch
          %487 = sbr.rel (%p485) target = $region68
        $region67: #{tpu_custom_call.1} parent=51 // pred_region
          %488 = dma.done %s481, 2048
        $region68: #{tpu_custom_call.1} parent=51 // pred_fallthru
          _
        %s489 = sand.u32 %s31, 1
        %s490 = scalar_lea.sflag [#allocation10], %s489
        %s491 = sand.u32 %s245, 1
        %s492 = smul.addr %s491, 256
        %s493 = scalar_lea.vmem [#allocation11], %s492
        // Predicated region
        $region69: #{tpu_custom_call.1} parent=51 // pred_check
          %p494 = pneg %p258
        $region70: #{tpu_custom_call.1} parent=51 // pred_check_branch
          %496 = sbr.rel (%p494) target = $region72
        $region71: #{tpu_custom_call.1} parent=51 // pred_region
          %497 = dma.done %s490, 4096
        $region72: #{tpu_custom_call.1} parent=51 // pred_fallthru
          _
        %s498 = sand.u32 %s60, 1
        %s499 = scalar_lea.sflag [#allocation4], %s498
        %s500 = sand.u32 %s60, 1
        %s501 = smul.addr %s500, 32
        %s502 = scalar_lea.vmem [#allocation3], %s501
        %p503 = pneg %p73
        %p504 = pneg %p70
        %s505 = sand.u32 %s31, 1
        %s506 = scalar_lea.sflag [#allocation7], %s505
        %s507 = sand.u32 %s86, 1
        %s508 = smul.addr %s507, 256
        %s509 = scalar_lea.vmem [#allocation6], %s508
        %p510 = pneg %p99
        %p511 = pneg %p96
        %p512 = pneg %p120
        %p513 = pneg %p117
        %s514 = sand.u32 %s31, 1
        %s515 = scalar_lea.sflag [#allocation7], %s514
        %s516 = sand.u32 %s135, 1
        %s517 = smul.addr %s516, 128
        %s518 = scalar_lea.vmem [#allocation8], %s517
        %p519 = pneg %p148
        %p520 = pneg %p145
        %s521 = sand.u32 %s31, 1
        %s522 = scalar_lea.sflag [#allocation10], %s521
        %s523 = sand.u32 %s163, 1
        %s524 = smul.addr %s523, 128
        %s525 = scalar_lea.vmem [#allocation9], %s524
        %p526 = pneg %p176
        %p527 = pneg %p173
        %s528 = smul.u32 2, %s37
        %p529 = scmp.lt.s32.totalorder %s36, 1
        %s530 = scalar_select %p529, %s36, 1
        %p531 = scmp.lt.s32.totalorder %s528, 1
        %s532 = scalar_select %p531, %s528, 1
        %s533 = smul.addr %s530, 2
        %s534 = sadd.s32 %s532, %s533
        %s535 = smul.addr %s534, 8
        %s536 = scalar_lea.vmem %s5, %s535
        %p537 = pneg %p204
        %p538 = pneg %p201
        %s539 = smul.u32 2, %s37
        %p540 = scmp.lt.s32.totalorder %s36, 1
        %s541 = scalar_select %p540, %s36, 1
        %p542 = scmp.lt.s32.totalorder %s539, 1
        %s543 = scalar_select %p542, %s539, 1
        %s544 = smul.addr %s541, 2
        %s545 = sadd.s32 %s543, %s544
        %s546 = smul.addr %s545, 8
        %s547 = scalar_lea.vmem %s6, %s546
        %p548 = pneg %p232
        %p549 = pneg %p229
        %s550 = sand.u32 %s31, 1
        %s551 = scalar_lea.sflag [#allocation10], %s550
        %s552 = sand.u32 %s245, 1
        %s553 = smul.addr %s552, 256
        %s554 = scalar_lea.vmem [#allocation11], %s553
        %p555 = pneg %p258
        %p556 = pneg %p255
        %p557 = pneg %p286
        %p558 = pneg %p283
        %s559 = sand.u32 %s273, 1
        %s560 = scalar_lea.sflag [#allocation5], %s559
        %s561 = sand.u32 %s273, 1
        %s562 = smul.addr %s561, 32
        %s563 = scalar_lea.vmem [#allocation12], %s562
        %s564 = smul.u32 2, %s37
        %s565 = smul.u32 2, %s37
        %p566 = scmp.lt.s32.totalorder %s36, 1
        %s567 = scalar_select %p566, %s36, 1
        %p568 = scmp.lt.s32.totalorder %s565, 1
        %s569 = scalar_select %p568, %s565, 1
        %s570 = smul.addr %s567, 2
        %s571 = sadd.s32 %s569, %s570
        %s572 = smul.addr %s571, 8
        %s573 = scalar_lea.vmem %s5, %s572
        %s574 = smul.u32 2, %s37
        %s575 = smul.u32 2, %s37
        %p576 = scmp.lt.s32.totalorder %s36, 1
        %s577 = scalar_select %p576, %s36, 1
        %p578 = scmp.lt.s32.totalorder %s575, 1
        %s579 = scalar_select %p578, %s575, 1
        %s580 = smul.addr %s577, 2
        %s581 = sadd.s32 %s579, %s580
        %s582 = smul.addr %s581, 8
        %s583 = scalar_lea.vmem %s6, %s582
        %s584 = smul.u32 2, %s37
        %s585 = smul.u32 2, %s37
        %p586 = scmp.eq.s32.totalorder %s38, 0
        // Predicated region
        $region73: #{tpu_custom_call.1} parent=51 // pred_check
          %p587 = pneg %p586
        $region74: #{tpu_custom_call.1} parent=51 // pred_check_branch
          %589 = sbr.rel (%p587) target = $region76
        $region75: #{tpu_custom_call.1} parent=51 // pred_region
          %590 = vst [vmem:[#allocation2] sm:$0xff] 0.0
          %591 = vst [vmem:[#allocation2 + $0x8] sm:$0xff] 0.0
          %592 = vst [vmem:[#allocation2 + $0x10] sm:$0xff] 0.0
          %593 = vst [vmem:[#allocation2 + $0x18] sm:$0xff] 0.0
        $region76: #{tpu_custom_call.1} parent=51 // pred_fallthru
          _
        %v594 = vld [vmem:[%s457] sm:$0xff]
        %v595 = vld [vmem:[%s457 + $0x8] sm:$0xff]
        %v596 = vld [vmem:[%s457 + $0x10] sm:$0xff]
        %v597 = vld [vmem:[%s457 + $0x18] sm:$0xff]
        %v598 = vld [vmem:[%s466] sm:$0xff]
        %v599 = vld [vmem:[%s466 + $0x8] sm:$0xff]
        %v600 = vld [vmem:[%s466 + $0x10] sm:$0xff]
        %v601 = vld [vmem:[%s466 + $0x18] sm:$0xff]
        %v602 = vld [vmem:[%s466 + $0x20] sm:$0xff]
        %v603 = vld [vmem:[%s466 + $0x28] sm:$0xff]
        %v604 = vld [vmem:[%s466 + $0x30] sm:$0xff]
        %v605 = vld [vmem:[%s466 + $0x38] sm:$0xff]
        %v606 = vld [vmem:[%s466 + $0x40] sm:$0xff]
        %v607 = vld [vmem:[%s466 + $0x48] sm:$0xff]
        %v608 = vld [vmem:[%s466 + $0x50] sm:$0xff]
        %v609 = vld [vmem:[%s466 + $0x58] sm:$0xff]
        %v610 = vld [vmem:[%s466 + $0x60] sm:$0xff]
        %v611 = vld [vmem:[%s466 + $0x68] sm:$0xff]
        %v612 = vld [vmem:[%s466 + $0x70] sm:$0xff]
        %v613 = vld [vmem:[%s466 + $0x78] sm:$0xff]
        %v614 = vld [vmem:[%s466 + $0x80] sm:$0xff]
        %v615 = vld [vmem:[%s466 + $0x88] sm:$0xff]
        %v616 = vld [vmem:[%s466 + $0x90] sm:$0xff]
        %v617 = vld [vmem:[%s466 + $0x98] sm:$0xff]
        %v618 = vld [vmem:[%s466 + $0xa0] sm:$0xff]
        %v619 = vld [vmem:[%s466 + $0xa8] sm:$0xff]
        %v620 = vld [vmem:[%s466 + $0xb0] sm:$0xff]
        %v621 = vld [vmem:[%s466 + $0xb8] sm:$0xff]
        %v622 = vld [vmem:[%s466 + $0xc0] sm:$0xff]
        %v623 = vld [vmem:[%s466 + $0xc8] sm:$0xff]
        %v624 = vld [vmem:[%s466 + $0xd0] sm:$0xff]
        %v625 = vld [vmem:[%s466 + $0xd8] sm:$0xff]
        %v626 = vld [vmem:[%s466 + $0xe0] sm:$0xff]
        %v627 = vld [vmem:[%s466 + $0xe8] sm:$0xff]
        %v628 = vld [vmem:[%s466 + $0xf0] sm:$0xff]
        %v629 = vld [vmem:[%s466 + $0xf8] sm:$0xff]
        %630 = vmatprep.subr.mxu0 0.0
        %631 = vmatpush1.msra.mxu0 %v613
        %632 = vmatprep.subr.mxu0 0.0
        %633 = vmatpush1.msra.mxu0 %v612
        %634 = vmatprep.subr.mxu0 0.0
        %635 = vmatpush1.msra.mxu0 %v611
        %636 = vmatprep.subr.mxu0 0.0
        %637 = vmatpush1.msra.mxu0 %v610
        %638 = vmatprep.subr.mxu0 0.0
        %639 = vmatpush1.msra.mxu0 %v609
        %640 = vmatprep.subr.mxu0 0.0
        %641 = vmatpush1.msra.mxu0 %v608
        %642 = vmatprep.subr.mxu0 0.0
        %643 = vmatpush1.msra.mxu0 %v607
        %644 = vmatprep.subr.mxu0 0.0
        %645 = vmatpush1.msra.mxu0 %v606
        %646 = vmatprep.subr.mxu0 0.0
        %647 = vmatpush1.msra.mxu0 %v605
        %648 = vmatprep.subr.mxu0 0.0
        %649 = vmatpush1.msra.mxu0 %v604
        %650 = vmatprep.subr.mxu0 0.0
        %651 = vmatpush1.msra.mxu0 %v603
        %652 = vmatprep.subr.mxu0 0.0
        %653 = vmatpush1.msra.mxu0 %v602
        %654 = vmatprep.subr.mxu0 0.0
        %655 = vmatpush1.msra.mxu0 %v601
        %656 = vmatprep.subr.mxu0 0.0
        %657 = vmatpush1.msra.mxu0 %v600
        %658 = vmatprep.subr.mxu0 0.0
        %659 = vmatpush1.msra.mxu0 %v599
        %660 = vmatprep.subr.mxu0 0.0
        %661 = vmatpush1.msra.mxu0 %v598
        %662 = vmatprep.subr.mxu0 0.0
        %663 = vmatpush2.msra.mxu0 %v629
        %664 = vmatprep.subr.mxu0 0.0
        %665 = vmatpush2.msra.mxu0 %v628
        %666 = vmatprep.subr.mxu0 0.0
        %667 = vmatpush2.msra.mxu0 %v627
        %668 = vmatprep.subr.mxu0 0.0
        %669 = vmatpush2.msra.mxu0 %v626
        %670 = vmatprep.subr.mxu0 0.0
        %671 = vmatpush2.msra.mxu0 %v625
        %672 = vmatprep.subr.mxu0 0.0
        %673 = vmatpush2.msra.mxu0 %v624
        %674 = vmatprep.subr.mxu0 0.0
        %675 = vmatpush2.msra.mxu0 %v623
        %676 = vmatprep.subr.mxu0 0.0
        %677 = vmatpush2.msra.mxu0 %v622
        %678 = vmatprep.subr.mxu0 0.0
        %679 = vmatpush2.msra.mxu0 %v621
        %680 = vmatprep.subr.mxu0 0.0
        %681 = vmatpush2.msra.mxu0 %v620
        %682 = vmatprep.subr.mxu0 0.0
        %683 = vmatpush2.msra.mxu0 %v619
        %684 = vmatprep.subr.mxu0 0.0
        %685 = vmatpush2.msra.mxu0 %v618
        %686 = vmatprep.subr.mxu0 0.0
        %687 = vmatpush2.msra.mxu0 %v617
        %688 = vmatprep.subr.mxu0 0.0
        %689 = vmatpush2.msra.mxu0 %v616
        %690 = vmatprep.subr.mxu0 0.0
        %691 = vmatpush2.msra.mxu0 %v615
        %692 = vmatprep.subr.mxu0 0.0
        %693 = vmatpush2.msra.mxu0 %v614
        %694 = vmatprep.mubr.f32.mxu0 %v595
        %695 = vmatmul.mubr.f32.gmra.mxu0 %v594
        %v696 = vpop.f32.mrf.mxu0
        %v697 = vadd.f32 0.0, %v696
        %v698 = vpop.f32.mrf.mxu0
        %699 = vmatprep.mubr.f32.mxu0 %v597
        %700 = vmatmul.mubr.f32.gmra.mxu0 %v596
        %v701 = vpop.f32.mrf.mxu0
        %v702 = vadd.f32 0.0, %v701
        %v703 = vpop.f32.mrf.mxu0
        %704 = vdwg.mxu0
        %v705 = vmul.f32 %v697, %v697
        %v706 = vmul.f32 %v702, %v702
        %707 = vadd.xlane.f32.xlu0 %v705
        %v708 = vpop.xlane.xlu0 %707
        %709 = vadd.xlane.f32.xlu0 %v706
        %v710 = vpop.xlane.xlu0 %709
        %v711 = vrcp.pop 128.0
        %v712 = vmul.f32 %v708, %v711
        %v713 = vmul.f32 %v710, %v711
        %v714 = vadd.f32 %v712, 1e-05
        %v715 = vadd.f32 %v713, 1e-05
        %v716 = vrsqrt.pop %v714
        %v717 = vrsqrt.pop %v715
        %v718 = vmul.f32 %v697, %v716
        %v719 = vmul.f32 %v702, %v717
        %v720 = vld [vmem:[%s2] sm:$0x1]
        %v722 = vlaneseq
        %v723 = vshrl.u32 %v722, 7
        %v724 = vsub.s32 0, %v723
        %v725 = vrot.slane %v720, %v724
        %v727 = vmul.f32 %v718, %v725
        %v728 = vmul.f32 %v719, %v725
        %v729 = vld [vmem:[%s475] sm:$0xff]
        %v730 = vld [vmem:[%s475 + $0x8] sm:$0xff]
        %v731 = vld [vmem:[%s475 + $0x10] sm:$0xff]
        %v732 = vld [vmem:[%s475 + $0x18] sm:$0xff]
        %v733 = vld [vmem:[%s475 + $0x20] sm:$0xff]
        %v734 = vld [vmem:[%s475 + $0x28] sm:$0xff]
        %v735 = vld [vmem:[%s475 + $0x30] sm:$0xff]
        %v736 = vld [vmem:[%s475 + $0x38] sm:$0xff]
        %v737 = vld [vmem:[%s475 + $0x40] sm:$0xff]
        %v738 = vld [vmem:[%s475 + $0x48] sm:$0xff]
        %v739 = vld [vmem:[%s475 + $0x50] sm:$0xff]
        %v740 = vld [vmem:[%s475 + $0x58] sm:$0xff]
        %v741 = vld [vmem:[%s475 + $0x60] sm:$0xff]
        %v742 = vld [vmem:[%s475 + $0x68] sm:$0xff]
        %v743 = vld [vmem:[%s475 + $0x70] sm:$0xff]
        %v744 = vld [vmem:[%s475 + $0x78] sm:$0xff]
        %v745 = vld [vmem:[%s484] sm:$0xff]
        %v746 = vld [vmem:[%s484 + $0x8] sm:$0xff]
        %v747 = vld [vmem:[%s484 + $0x10] sm:$0xff]
        %v748 = vld [vmem:[%s484 + $0x18] sm:$0xff]
        %v749 = vld [vmem:[%s484 + $0x20] sm:$0xff]
        %v750 = vld [vmem:[%s484 + $0x28] sm:$0xff]
        %v751 = vld [vmem:[%s484 + $0x30] sm:$0xff]
        %v752 = vld [vmem:[%s484 + $0x38] sm:$0xff]
        %v753 = vld [vmem:[%s484 + $0x40] sm:$0xff]
        %v754 = vld [vmem:[%s484 + $0x48] sm:$0xff]
        %v755 = vld [vmem:[%s484 + $0x50] sm:$0xff]
        %v756 = vld [vmem:[%s484 + $0x58] sm:$0xff]
        %v757 = vld [vmem:[%s484 + $0x60] sm:$0xff]
        %v758 = vld [vmem:[%s484 + $0x68] sm:$0xff]
        %v759 = vld [vmem:[%s484 + $0x70] sm:$0xff]
        %v760 = vld [vmem:[%s484 + $0x78] sm:$0xff]
        %761 = vmatprep.subr.mxu0 0.0
        %762 = vmatpush1.xpose.msra.mxu0 %v744
        %763 = vmatprep.subr.mxu0 0.0
        %764 = vmatpush1.xpose.msra.mxu0 %v743
        %765 = vmatprep.subr.mxu0 0.0
        %766 = vmatpush1.xpose.msra.mxu0 %v742
        %767 = vmatprep.subr.mxu0 0.0
        %768 = vmatpush1.xpose.msra.mxu0 %v741
        %769 = vmatprep.subr.mxu0 0.0
        %770 = vmatpush1.xpose.msra.mxu0 %v740
        %771 = vmatprep.subr.mxu0 0.0
        %772 = vmatpush1.xpose.msra.mxu0 %v739
        %773 = vmatprep.subr.mxu0 0.0
        %774 = vmatpush1.xpose.msra.mxu0 %v738
        %775 = vmatprep.subr.mxu0 0.0
        %776 = vmatpush1.xpose.msra.mxu0 %v737
        %777 = vmatprep.subr.mxu0 0.0
        %778 = vmatpush1.xpose.msra.mxu0 %v736
        %779 = vmatprep.subr.mxu0 0.0
        %780 = vmatpush1.xpose.msra.mxu0 %v735
        %781 = vmatprep.subr.mxu0 0.0
        %782 = vmatpush1.xpose.msra.mxu0 %v734
        %783 = vmatprep.subr.mxu0 0.0
        %784 = vmatpush1.xpose.msra.mxu0 %v733
        %785 = vmatprep.subr.mxu0 0.0
        %786 = vmatpush1.xpose.msra.mxu0 %v732
        %787 = vmatprep.subr.mxu0 0.0
        %788 = vmatpush1.xpose.msra.mxu0 %v731
        %789 = vmatprep.subr.mxu0 0.0
        %790 = vmatpush1.xpose.msra.mxu0 %v730
        %791 = vmatprep.subr.mxu0 0.0
        %792 = vmatpush1.xpose.msra.mxu0 %v729
        %793 = vmatprep.subr.mxu0 0.0
        %794 = vmatpush2.xpose.msra.mxu0 0.0
        %795 = vmatprep.subr.mxu0 0.0
        %796 = vmatpush2.xpose.msra.mxu0 0.0
        %797 = vmatprep.subr.mxu0 0.0
        %798 = vmatpush2.xpose.msra.mxu0 0.0
        %799 = vmatprep.subr.mxu0 0.0
        %800 = vmatpush2.xpose.msra.mxu0 0.0
        %801 = vmatprep.subr.mxu0 0.0
        %802 = vmatpush2.xpose.msra.mxu0 0.0
        %803 = vmatprep.subr.mxu0 0.0
        %804 = vmatpush2.xpose.msra.mxu0 0.0
        %805 = vmatprep.subr.mxu0 0.0
        %806 = vmatpush2.xpose.msra.mxu0 0.0
        %807 = vmatprep.subr.mxu0 0.0
        %808 = vmatpush2.xpose.msra.mxu0 0.0
        %809 = vmatprep.subr.mxu0 0.0
        %810 = vmatpush2.xpose.msra.mxu0 0.0
        %811 = vmatprep.subr.mxu0 0.0
        %812 = vmatpush2.xpose.msra.mxu0 0.0
        %813 = vmatprep.subr.mxu0 0.0
        %814 = vmatpush2.xpose.msra.mxu0 0.0
        %815 = vmatprep.subr.mxu0 0.0
        %816 = vmatpush2.xpose.msra.mxu0 0.0
        %817 = vmatprep.subr.mxu0 0.0
        %818 = vmatpush2.xpose.msra.mxu0 0.0
        %819 = vmatprep.subr.mxu0 0.0
        %820 = vmatpush2.xpose.msra.mxu0 0.0
        %821 = vmatprep.subr.mxu0 0.0
        %822 = vmatpush2.xpose.msra.mxu0 0.0
        %823 = vmatprep.subr.mxu0 0.0
        %824 = vmatpush2.xpose.msra.mxu0 0.0
        %825 = vmatprep.mubr.f32.mxu0 0.0
        %826 = vmatmul.mubr.f32.gmra.mxu0 %v727
        %v827 = vpop.f32.mrf.mxu0
        %v828 = vadd.f32 0.0, %v827
        %v829 = vpop.f32.mrf.mxu0
        %830 = vmatprep.mubr.f32.mxu0 0.0
        %831 = vmatmul.mubr.f32.gmra.mxu0 %v728
        %v832 = vpop.f32.mrf.mxu0
        %v833 = vadd.f32 0.0, %v832
        %v834 = vpop.f32.mrf.mxu0
        %835 = vdwg.mxu0
        %v836 = vmul.f32 %v828, 0.088388346
        %v837 = vmul.f32 %v833, 0.088388346
        %v838 = vld [vmem:[%s573] sm:$0xff]
        %v839 = vld [vmem:[%s573 + $0x8] sm:$0xff]
        %v840 = vadd.f32 %v836, %v838
        %v841 = vadd.f32 %v837, %v839
        %842 = vmax.xlane.f32.xlu0 %v840
        %v843 = vpop.xlane.xlu0 %842
        %844 = vmax.xlane.f32.xlu0 %v841
        %v845 = vpop.xlane.xlu0 %844
        %v846 = vsub.f32 %v840, %v843
        %v847 = vsub.f32 %v841, %v845
        %v848 = vmul.f32 %v846, 1.442695
        %v849 = vpow.pop %v848
        %v850 = vmul.f32 %v847, 1.442695
        %v851 = vpow.pop %v850
        %852 = vadd.xlane.f32.xlu0 %v849
        %v853 = vpop.xlane.xlu0 %852
        %854 = vadd.xlane.f32.xlu0 %v851
        %v855 = vpop.xlane.xlu0 %854
        %v856 = vrcp.pop %v853
        %v857 = vrcp.pop %v855
        %v858 = vmul.f32 %v849, %v856
        %v859 = vmul.f32 %v851, %v857
        %860 = vmatprep.subr.mxu0 0.0
        %861 = vmatpush1.msra.mxu0 %v760
        %862 = vmatprep.subr.mxu0 0.0
        %863 = vmatpush1.msra.mxu0 %v759
        %864 = vmatprep.subr.mxu0 0.0
        %865 = vmatpush1.msra.mxu0 %v758
        %866 = vmatprep.subr.mxu0 0.0
        %867 = vmatpush1.msra.mxu0 %v757
        %868 = vmatprep.subr.mxu0 0.0
        %869 = vmatpush1.msra.mxu0 %v756
        %870 = vmatprep.subr.mxu0 0.0
        %871 = vmatpush1.msra.mxu0 %v755
        %872 = vmatprep.subr.mxu0 0.0
        %873 = vmatpush1.msra.mxu0 %v754
        %874 = vmatprep.subr.mxu0 0.0
        %875 = vmatpush1.msra.mxu0 %v753
        %876 = vmatprep.subr.mxu0 0.0
        %877 = vmatpush1.msra.mxu0 %v752
        %878 = vmatprep.subr.mxu0 0.0
        %879 = vmatpush1.msra.mxu0 %v751
        %880 = vmatprep.subr.mxu0 0.0
        %881 = vmatpush1.msra.mxu0 %v750
        %882 = vmatprep.subr.mxu0 0.0
        %883 = vmatpush1.msra.mxu0 %v749
        %884 = vmatprep.subr.mxu0 0.0
        %885 = vmatpush1.msra.mxu0 %v748
        %886 = vmatprep.subr.mxu0 0.0
        %887 = vmatpush1.msra.mxu0 %v747
        %888 = vmatprep.subr.mxu0 0.0
        %889 = vmatpush1.msra.mxu0 %v746
        %890 = vmatprep.subr.mxu0 0.0
        %891 = vmatpush1.msra.mxu0 %v745
        %892 = vmatprep.subr.mxu0 0.0
        %893 = vmatpush2.msra.mxu0 0.0
        %894 = vmatprep.subr.mxu0 0.0
        %895 = vmatpush2.msra.mxu0 0.0
        %896 = vmatprep.subr.mxu0 0.0
        %897 = vmatpush2.msra.mxu0 0.0
        %898 = vmatprep.subr.mxu0 0.0
        %899 = vmatpush2.msra.mxu0 0.0
        %900 = vmatprep.subr.mxu0 0.0
        %901 = vmatpush2.msra.mxu0 0.0
        %902 = vmatprep.subr.mxu0 0.0
        %903 = vmatpush2.msra.mxu0 0.0
        %904 = vmatprep.subr.mxu0 0.0
        %905 = vmatpush2.msra.mxu0 0.0
        %906 = vmatprep.subr.mxu0 0.0
        %907 = vmatpush2.msra.mxu0 0.0
        %908 = vmatprep.subr.mxu0 0.0
        %909 = vmatpush2.msra.mxu0 0.0
        %910 = vmatprep.subr.mxu0 0.0
        %911 = vmatpush2.msra.mxu0 0.0
        %912 = vmatprep.subr.mxu0 0.0
        %913 = vmatpush2.msra.mxu0 0.0
        %914 = vmatprep.subr.mxu0 0.0
        %915 = vmatpush2.msra.mxu0 0.0
        %916 = vmatprep.subr.mxu0 0.0
        %917 = vmatpush2.msra.mxu0 0.0
        %918 = vmatprep.subr.mxu0 0.0
        %919 = vmatpush2.msra.mxu0 0.0
        %920 = vmatprep.subr.mxu0 0.0
        %921 = vmatpush2.msra.mxu0 0.0
        %922 = vmatprep.subr.mxu0 0.0
        %923 = vmatpush2.msra.mxu0 0.0
        %924 = vmatprep.mubr.f32.mxu0 0.0
        %925 = vmatmul.mubr.f32.gmra.mxu0 %v858
        %v926 = vpop.f32.mrf.mxu0
        %v927 = vadd.f32 0.0, %v926
        %v928 = vpop.f32.mrf.mxu0
        %929 = vmatprep.mubr.f32.mxu0 0.0
        %930 = vmatmul.mubr.f32.gmra.mxu0 %v859
        %v931 = vpop.f32.mrf.mxu0
        %v932 = vadd.f32 0.0, %v931
        %v933 = vpop.f32.mrf.mxu0
        %934 = vdwg.mxu0
        %v935 = vld [vmem:[%s583] sm:$0xff]
        %v936 = vld [vmem:[%s583 + $0x8] sm:$0xff]
        %938 = vset.pattern.permute.xlu0 0
        %939 = vperm.xlu0 %938, %v935
        %v940 = vpop.permute.xlu0 %939
        %943 = vset.pattern.permute.xlu0 0
        %944 = vperm.xlu0 %943, %v936
        %v945 = vpop.permute.xlu0 %944
        %v947 = vmul.f32 %v927, %v940
        %v948 = vmul.f32 %v932, %v945
        %v949 = vld [vmem:[#allocation2] sm:$0xff]
        %v950 = vld [vmem:[#allocation2 + $0x8] sm:$0xff]
        %v951 = vld [vmem:[#allocation2 + $0x10] sm:$0xff]
        %v952 = vld [vmem:[#allocation2 + $0x18] sm:$0xff]
        %v953 = vld [vmem:[%s493] sm:$0xff]
        %v954 = vld [vmem:[%s493 + $0x8] sm:$0xff]
        %v955 = vld [vmem:[%s493 + $0x10] sm:$0xff]
        %v956 = vld [vmem:[%s493 + $0x18] sm:$0xff]
        %v957 = vld [vmem:[%s493 + $0x20] sm:$0xff]
        %v958 = vld [vmem:[%s493 + $0x28] sm:$0xff]
        %v959 = vld [vmem:[%s493 + $0x30] sm:$0xff]
        %v960 = vld [vmem:[%s493 + $0x38] sm:$0xff]
        %v961 = vld [vmem:[%s493 + $0x40] sm:$0xff]
        %v962 = vld [vmem:[%s493 + $0x48] sm:$0xff]
        %v963 = vld [vmem:[%s493 + $0x50] sm:$0xff]
        %v964 = vld [vmem:[%s493 + $0x58] sm:$0xff]
        %v965 = vld [vmem:[%s493 + $0x60] sm:$0xff]
        %v966 = vld [vmem:[%s493 + $0x68] sm:$0xff]
        %v967 = vld [vmem:[%s493 + $0x70] sm:$0xff]
        %v968 = vld [vmem:[%s493 + $0x78] sm:$0xff]
        %v969 = vld [vmem:[%s493 + $0x80] sm:$0xff]
        %v970 = vld [vmem:[%s493 + $0x88] sm:$0xff]
        %v971 = vld [vmem:[%s493 + $0x90] sm:$0xff]
        %v972 = vld [vmem:[%s493 + $0x98] sm:$0xff]
        %v973 = vld [vmem:[%s493 + $0xa0] sm:$0xff]
        %v974 = vld [vmem:[%s493 + $0xa8] sm:$0xff]
        %v975 = vld [vmem:[%s493 + $0xb0] sm:$0xff]
        %v976 = vld [vmem:[%s493 + $0xb8] sm:$0xff]
        %v977 = vld [vmem:[%s493 + $0xc0] sm:$0xff]
        %v978 = vld [vmem:[%s493 + $0xc8] sm:$0xff]
        %v979 = vld [vmem:[%s493 + $0xd0] sm:$0xff]
        %v980 = vld [vmem:[%s493 + $0xd8] sm:$0xff]
        %v981 = vld [vmem:[%s493 + $0xe0] sm:$0xff]
        %v982 = vld [vmem:[%s493 + $0xe8] sm:$0xff]
        %v983 = vld [vmem:[%s493 + $0xf0] sm:$0xff]
        %v984 = vld [vmem:[%s493 + $0xf8] sm:$0xff]
        %985 = vmatprep.subr.mxu0 %v984
        %986 = vmatpush1.msra.mxu0 %v983
        %987 = vmatprep.subr.mxu0 %v982
        %988 = vmatpush1.msra.mxu0 %v981
        %989 = vmatprep.subr.mxu0 %v980
        %990 = vmatpush1.msra.mxu0 %v979
        %991 = vmatprep.subr.mxu0 %v978
        %992 = vmatpush1.msra.mxu0 %v977
        %993 = vmatprep.subr.mxu0 %v976
        %994 = vmatpush1.msra.mxu0 %v975
        %995 = vmatprep.subr.mxu0 %v974
        %996 = vmatpush1.msra.mxu0 %v973
        %997 = vmatprep.subr.mxu0 %v972
        %998 = vmatpush1.msra.mxu0 %v971
        %999 = vmatprep.subr.mxu0 %v970
        %1000 = vmatpush1.msra.mxu0 %v969
        %1001 = vmatprep.subr.mxu0 %v968
        %1002 = vmatpush1.msra.mxu0 %v967
        %1003 = vmatprep.subr.mxu0 %v966
        %1004 = vmatpush1.msra.mxu0 %v965
        %1005 = vmatprep.subr.mxu0 %v964
        %1006 = vmatpush1.msra.mxu0 %v963
        %1007 = vmatprep.subr.mxu0 %v962
        %1008 = vmatpush1.msra.mxu0 %v961
        %1009 = vmatprep.subr.mxu0 %v960
        %1010 = vmatpush1.msra.mxu0 %v959
        %1011 = vmatprep.subr.mxu0 %v958
        %1012 = vmatpush1.msra.mxu0 %v957
        %1013 = vmatprep.subr.mxu0 %v956
        %1014 = vmatpush1.msra.mxu0 %v955
        %1015 = vmatprep.subr.mxu0 %v954
        %1016 = vmatpush1.msra.mxu0 %v953
        %1017 = vmatprep.subr.mxu0 0.0
        %1018 = vmatpush2.msra.mxu0 0.0
        %1019 = vmatprep.subr.mxu0 0.0
        %1020 = vmatpush2.msra.mxu0 0.0
        %1021 = vmatprep.subr.mxu0 0.0
        %1022 = vmatpush2.msra.mxu0 0.0
        %1023 = vmatprep.subr.mxu0 0.0
        %1024 = vmatpush2.msra.mxu0 0.0
        %1025 = vmatprep.subr.mxu0 0.0
        %1026 = vmatpush2.msra.mxu0 0.0
        %1027 = vmatprep.subr.mxu0 0.0
        %1028 = vmatpush2.msra.mxu0 0.0
        %1029 = vmatprep.subr.mxu0 0.0
        %1030 = vmatpush2.msra.mxu0 0.0
        %1031 = vmatprep.subr.mxu0 0.0
        %1032 = vmatpush2.msra.mxu0 0.0
        %1033 = vmatprep.subr.mxu0 0.0
        %1034 = vmatpush2.msra.mxu0 0.0
        %1035 = vmatprep.subr.mxu0 0.0
        %1036 = vmatpush2.msra.mxu0 0.0
        %1037 = vmatprep.subr.mxu0 0.0
        %1038 = vmatpush2.msra.mxu0 0.0
        %1039 = vmatprep.subr.mxu0 0.0
        %1040 = vmatpush2.msra.mxu0 0.0
        %1041 = vmatprep.subr.mxu0 0.0
        %1042 = vmatpush2.msra.mxu0 0.0
        %1043 = vmatprep.subr.mxu0 0.0
        %1044 = vmatpush2.msra.mxu0 0.0
        %1045 = vmatprep.subr.mxu0 0.0
        %1046 = vmatpush2.msra.mxu0 0.0
        %1047 = vmatprep.subr.mxu0 0.0
        %1048 = vmatpush2.msra.mxu0 0.0
        %1049 = vmatprep.mubr.f32.mxu0 0.0
        %1050 = vmatmul.mubr.f32.gmra.mxu0 %v947
        %v1051 = vpop.f32.mrf.mxu0
        %v1052 = vadd.f32 0.0, %v1051
        %v1053 = vpop.f32.mrf.mxu0
        %v1054 = vadd.f32 0.0, %v1053
        %1055 = vmatprep.mubr.f32.mxu0 0.0
        %1056 = vmatmul.mubr.f32.gmra.mxu0 %v948
        %v1057 = vpop.f32.mrf.mxu0
        %v1058 = vadd.f32 0.0, %v1057
        %v1059 = vpop.f32.mrf.mxu0
        %v1060 = vadd.f32 0.0, %v1059
        %1061 = vdwg.mxu0
        %v1062 = vadd.f32 %v949, %v1052
        %v1063 = vadd.f32 %v950, %v1054
        %v1064 = vadd.f32 %v951, %v1058
        %v1065 = vadd.f32 %v952, %v1060
        %1066 = vst [vmem:[#allocation2] sm:$0xff] %v1062
        %1067 = vst [vmem:[#allocation2 + $0x8] sm:$0xff] %v1063
        %1068 = vst [vmem:[#allocation2 + $0x10] sm:$0xff] %v1064
        %1069 = vst [vmem:[#allocation2 + $0x18] sm:$0xff] %v1065
        %p1070 = scmp.eq.s32.totalorder %s38, 3
        // Predicated region
        $region77: #{tpu_custom_call.1} parent=51 // pred_check
          %p1071 = pneg %p1070
        $region78: #{tpu_custom_call.1} parent=51 // pred_check_branch
          %1073 = sbr.rel (%p1071) target = $region80
        $region79: #{tpu_custom_call.1} parent=51 // pred_region
          %v1074 = vld [vmem:[#allocation2] sm:$0xff]
          %v1075 = vld [vmem:[#allocation2 + $0x8] sm:$0xff]
          %v1076 = vld [vmem:[#allocation2 + $0x10] sm:$0xff]
          %v1077 = vld [vmem:[#allocation2 + $0x18] sm:$0xff]
          %1078 = vst [vmem:[%s563] sm:$0xff] %v1074
          %1079 = vst [vmem:[%s563 + $0x8] sm:$0xff] %v1075
          %1080 = vst [vmem:[%s563 + $0x10] sm:$0xff] %v1076
          %1081 = vst [vmem:[%s563 + $0x18] sm:$0xff] %v1077
        $region80: #{tpu_custom_call.1} parent=51 // pred_fallthru
          _
        %s1082 = sand.u32 %s273, 1
        %s1083 = scalar_lea.sflag [#allocation5], %s1082
        %s1084 = sand.u32 %s273, 1
        %s1085 = smul.addr %s1084, 32
        %s1086 = scalar_lea.vmem [#allocation12], %s1085
        // Predicated region
        $region81: #{tpu_custom_call.1} parent=51 // pred_check
          %p1087 = pneg %p283
        $region82: #{tpu_custom_call.1} parent=51 // pred_check_branch
          %1089 = sbr.rel (%p1087) target = $region84
        $region83: #{tpu_custom_call.1} parent=51 // pred_region
          %s1090 = smul.u32 2, %s37
          %s1092 = ssub.s32 512, 512
          %1093 = vsyncadd %s1083, %s1092
          %s1094 = smul.addr %s1090, 2
          %s1095 = smul.addr %s36, 4
          %s1096 = sadd.s32 %s1094, %s1095
          %s1097 = smul.addr %s1096, 128
          %s1098 = scalar_lea.hbm %s8, %s1097
          %s1099 = sshll.u32 %s1086, 4
          %s1100 = int_to_ptr.vmem [resolvable:$true] %s1099
          %1105 = dma.vmem_to_hbm [thread:$0]  %s1100, 512, %s1098, %s1083, 256, 256, 16
        $region84: #{tpu_custom_call.1} parent=51 // pred_fallthru
          _
      $region52: #{tpu_custom_call.1} parent=5 // pred_fallthru
        _
      %p1106 = scmp.le.s32.totalorder 2, %s26
      // Predicated region
      $region85: #{tpu_custom_call.1} parent=5 // pred_check
        %p1107 = pneg %p1106
      $region86: #{tpu_custom_call.1} parent=5 // pred_check_branch
        %1109 = sbr.rel (%p1107) target = $region88
      $region87: #{tpu_custom_call.1} parent=5 // pred_region
        %s1110 = ssub.s32 %s26, 2
        // Predicated region
        $region89: #{tpu_custom_call.1} parent=87 // pred_check
          %p1111 = pneg %p289
        $region90: #{tpu_custom_call.1} parent=87 // pred_check_branch
          %1113 = sbr.rel (%p1111) target = $region92
        $region91: #{tpu_custom_call.1} parent=87 // pred_region
          %s1114 = sand.u32 %s274, 1
          %s1115 = scalar_lea.sflag [#allocation5], %s1114
          %s1116 = sand.u32 %s274, 1
          %s1117 = smul.addr %s1116, 32
          %s1118 = scalar_lea.vmem [#allocation12], %s1117
          %1119 = dma.done %s1115, 512
        $region92: #{tpu_custom_call.1} parent=87 // pred_fallthru
          _
      $region88: #{tpu_custom_call.1} parent=5 // pred_fallthru
        _
    $region6: #{tpu_custom_call.1} parent=1 // loop_footer
      %s30 = sadd.s32 1, %s26
    $region7: #{tpu_custom_call.1} parent=1 // loop_footer_branch
      %25 = sbr.rel target = $region3
    $region8: #{tpu_custom_call.1} parent=1 // loop_exit
      _
    %1120 = vsyncpa [#allocation4], 1
    %s1121 = scalar_lea.sflag [#allocation4], 1
    %1122 = vsyncpa %s1121, 1
    %1123 = vsyncpa [#allocation7], 1
    %s1124 = scalar_lea.sflag [#allocation7], 1
    %1125 = vsyncpa %s1124, 1
    %1126 = vsyncpa [#allocation10], 1
    %s1127 = scalar_lea.sflag [#allocation10], 1
    %1128 = vsyncpa %s1127, 1
    %1129 = vsyncpa [#allocation5], 1
    %s1130 = scalar_lea.sflag [#allocation5], 1
    %1131 = vsyncpa %s1130, 1

</llo_original>
